<compile_context>
chip_gen: v7x
topology: tpu7x:2x2x1
jax: 0.10.0
libtpu: 0.0.40
codegen_flags: <defaults>
</compile_context>

<pallas_src>
import functools

import jax
import jax.numpy as jnp
import numpy as np
from jax.experimental import pallas as pl
from jax.experimental.pallas import tpu as pltpu

ALPHA = 0.95      # triplet weight
MARGIN = 1.0      # TripletMarginLoss margin
EPS = 1e-6        # PyTorch pairwise_distance eps (added to the raw difference)


def _triplet_reid_loss_kernel(logits_ref, tgt_ref, feats_ref, out_ref,
                              c_acc, t_acc, *, c_scale, t_scale, batch_on_lanes):
    step = pl.program_id(1)

    @pl.when(step == 0)
    def _init():
        c_acc[...] = jnp.zeros_like(c_acc)
        t_acc[...] = jnp.zeros_like(t_acc)

    # Inputs may be streamed as bf16 (halves HBM traffic on v5e/v6e); upcast once
    # right after the load -- all math and both accumulators stay in f32.
    logits = logits_ref[...].astype(jnp.float32)   # (12, TB, C) | (12, C, TB)
    feats = feats_ref[...].astype(jnp.float32)     # (12, TB, D) | (12, D, TB)
    tgt = tgt_ref[...]                             # (3, TB, 1)  | (3, 1, TB)   int32

    if batch_on_lanes:           # batch on the lane (last) axis, classes/feats on sublanes
        cls_ax, b_ax = 2, 3      # axes of the 4-D (3, 4, C, TB) view
        f_ax, fb_ax = 1, 2       # axes of the 3-D (4, D, TB) views
    else:                        # classes / features on the lane axis (realistic ReID C,D)
        cls_ax, b_ax = 3, 2      # (3, 4, TB, C)
        f_ax, fb_ax = 2, 1       # (4, TB, D)

    # ---- cross entropy: sum_b (logsumexp - picked logit), per (role, head) ----
    logits4 = logits.reshape(3, 4, *logits.shape[1:])
    m = jnp.max(logits4, axis=cls_ax, keepdims=True)
    lse = m + jnp.log(jnp.sum(jnp.exp(logits4 - m), axis=cls_ax, keepdims=True))

    # picked[g,h,b] = logits[g,h,b,target[g,b]] via a small broadcast iota-compare.
    cls_idx = jax.lax.broadcasted_iota(jnp.int32, (1, 1) + logits.shape[1:], cls_ax)
    tgt4 = tgt.reshape(3, 1, *tgt.shape[1:])
    picked = jnp.sum(jnp.where(cls_idx == tgt4, logits4, 0.0),
                     axis=cls_ax, keepdims=True)
    ce = lse - picked                                           # (3,4,TB,1) | (3,4,1,TB)
    c_acc[...] += jnp.sum(ce, axis=b_ax, keepdims=True).reshape(12, 1)

    # ---- triplet margin loss, p=2 (eps added to the raw difference, as in PyTorch) ----
    a, p, n = feats[0:4], feats[4:8], feats[8:12]
    dap = a - p + EPS
    dan = a - n + EPS
    d_ap = jnp.sqrt(jnp.sum(dap * dap, axis=f_ax, keepdims=True))
    d_an = jnp.sqrt(jnp.sum(dan * dan, axis=f_ax, keepdims=True))
    trip = jnp.maximum(d_ap - d_an + MARGIN, 0.0)               # (4,TB,1) | (4,1,TB)
    t_acc[...] += jnp.sum(trip, axis=fb_ax, keepdims=True).reshape(4, 1)

    # ---- finalize: scale partial sums and write this split's output row ----
    @pl.when(step == pl.num_programs(1) - 1)
    def _finalize():
        val = c_scale * jnp.sum(c_acc[...]) + t_scale * jnp.sum(t_acc[...])
        out_ref[...] = jnp.broadcast_to(val, out_ref.shape).astype(out_ref.dtype)


def _vmem_capacity_bytes():
    try:
        return int(pltpu.get_tpu_info().vmem_capacity_bytes)
    except Exception:
        return 64 * 1024 * 1024      # conservative fallback (v7x per-core VMEM)


def _pick_batch_tile(rows, row_bytes, budget_bytes, quantum, max_tile=4096):
    """Largest batch tile that divides `rows`, is a multiple of `quantum`
    (or equals `rows`), and keeps the double-buffered working set in budget."""
    cap = min(max_tile, max(quantum, budget_bytes // max(row_bytes, 1)))
    if rows <= cap:
        return rows
    tb = (cap // quantum) * quantum
    while tb >= quantum:
        if rows % tb == 0:
            return tb
        tb -= quantum
    return rows


def triplet_reid_loss(cl_logits, targets, feats, *, batch_tile=None, num_splits=None,
                      stream_dtype=None, batch_on_lanes=None, logits_buffers=2):
    """cl_logits: (3, 4, B, C); targets: (3, B) int; feats: (3, 4, B, D). Returns (1,) f32."""
    G, H, B, C = cl_logits.shape
    assert (G, H) == (3, 4), cl_logits.shape
    D = feats.shape[-1]
    assert feats.shape == (G, H, B, D), feats.shape
    assert targets.shape == (G, B), targets.shape

    # Hard integer labels in [0, C) are assumed (as with PyTorch CrossEntropyLoss).
    # Best-effort check when targets are concrete; silently skipped under tracing.
    try:
        t_host = np.asarray(targets)
    except Exception:
        t_host = None
    if t_host is not None:
        assert t_host.min() >= 0 and t_host.max() < C, \
            "targets must be hard integer class labels in [0, C)"

    # Optional bf16 streaming of the two dominant HBM streams (big win on v5e/v6e).
    if stream_dtype is not None:
        cl_logits = cl_logits.astype(stream_dtype)
        feats = feats.astype(stream_dtype)
    itemsize = max(jnp.dtype(cl_logits.dtype).itemsize, jnp.dtype(feats.dtype).itemsize)

    # Lane-dense layout: when both C and D are below a vreg's 128 lanes, put the
    # batch on the lane axis so VPU/XLU/EUP work is not mostly padding.
    if batch_on_lanes is None:
        batch_on_lanes = (C < 128 and D < 128)
    quantum = 128 if batch_on_lanes else 8

    # Generation-aware tiling / VMEM budget (v5e/v6e: 128 MiB VMEM; v7x: 64 MiB).
    vmem_cap = _vmem_capacity_bytes()
    budget = int(min(vmem_cap // 5, 24 << 20))     # double-buffered working set
    vmem_limit = int(min(vmem_cap // 2, 64 << 20))

    # Leading "parallel" batch split: 2-way whenever divisibility allows (uses both
    # TensorCores on v7x / megacore chips; a negligible outer loop on 1-TC chips).
    if num_splits is None:
        num_splits = 2 if B % (2 * quantum) == 0 else 1
    assert B % num_splits == 0, (B, num_splits)
    rows = B // num_splits

    row_bytes = 2 * (12 * (C + D) * itemsize + 3 * 4)   # per batch row, double-buffered
    if batch_tile is None:
        tb = (_pick_batch_tile(rows, row_bytes, budget, quantum)
              if rows % quantum == 0 else rows)
    else:
        tb = batch_tile
    assert rows % tb == 0, (B, num_splits, tb)
    assert tb % quantum == 0 or (num_splits == 1 and tb == B), (
        tb, quantum, num_splits, f"batch tile must be a multiple of {quantum}")
    steps = rows // tb

    # Operand layouts. The leading-dim reshapes are free; the swapaxes transpose only
    # triggers in the small-C/D regime where the extra traffic is negligible.
    logits = cl_logits.reshape(G * H, B, C)
    feats_f = feats.reshape(G * H, B, D)
    tgt = targets.astype(jnp.int32)
    if batch_on_lanes:
        logits = jnp.swapaxes(logits, 1, 2)           # (12, C, B)
        feats_f = jnp.swapaxes(feats_f, 1, 2)         # (12, D, B)
        tgt = tgt.reshape(G, 1, B)                    # lane-dense targets
        logits_block = (G * H, C, tb)
        feats_block = (G * H, D, tb)
        tgt_block = (G, 1, tb)
        batch_map = lambda p, i: (0, 0, p * steps + i)
    else:
        tgt = tgt.reshape(G, B, 1)
        logits_block = (G * H, tb, C)
        feats_block = (G * H, tb, D)
        tgt_block = (G, tb, 1)
        batch_map = lambda p, i: (0, p * steps + i, 0)

    if logits_buffers in (None, 2):
        logits_spec = pl.BlockSpec(logits_block, batch_map)
    else:   # optional deeper pipelining of the dominant stream
        logits_spec = pl.BlockSpec(logits_block, batch_map,
                                   pipeline_mode=pl.Buffered(logits_buffers))

    kernel = functools.partial(
        _triplet_reid_loss_kernel,
        # NOTE: baked as Python floats; a change in B retriggers compilation (the
        # shape change would anyway) -- flagged in the perf review, acceptable here.
        c_scale=(1.0 - ALPHA) / (3.0 * B),
        t_scale=ALPHA / B,
        batch_on_lanes=batch_on_lanes,
    )

    grid_spec = pltpu.PrefetchScalarGridSpec(
        num_scalar_prefetch=0,
        grid=(num_splits, steps),
        in_specs=[
            logits_spec,
            pl.BlockSpec(tgt_block, batch_map),
            pl.BlockSpec(feats_block, batch_map),
        ],
        # One (8,128)-padded f32 tile per split; element [p, 0, 0] carries the partial loss.
        out_specs=pl.BlockSpec((1, 8, 128), lambda p, i: (p, 0, 0)),
        scratch_shapes=[
            pltpu.VMEM((G * H, 1), jnp.float32),   # per-(role,head) CE partial sums
            pltpu.VMEM((H, 1), jnp.float32),       # per-head triplet partial sums
        ],
    )

    out = pl.pallas_call(
        kernel,
        out_shape=jax.ShapeDtypeStruct((num_splits, 8, 128), jnp.float32),
        grid_spec=grid_spec,
        compiler_params=pltpu.CompilerParams(
            dimension_semantics=("parallel", "arbitrary"),   # split axis x batch reduction
            vmem_limit_bytes=vmem_limit,
        ),
    )(logits, tgt, feats_f)
    return jnp.sum(out[:, 0, 0]).reshape(1)   # PyTorch module returns a shape-(1,) tensor


def reference_loss(cl_logits, targets, feats):
    """Pure-JAX reference mirroring the PyTorch forward (use_triplet=True)."""
    G, H, B, C = cl_logits.shape
    logp = jax.nn.log_softmax(cl_logits.astype(jnp.float32), axis=-1)      # (3,4,B,C)
    oh = jax.nn.one_hot(targets, C, dtype=jnp.float32)                     # (3,B,C)
    ce = -jnp.sum(logp * oh[:, None], axis=-1)                             # (3,4,B)
    c = jnp.sum(jnp.mean(ce, axis=-1)) / 3.0
    a = feats[0].astype(jnp.float32)
    p = feats[1].astype(jnp.float32)
    n = feats[2].astype(jnp.float32)
    d_ap = jnp.sqrt(jnp.sum((a - p + EPS) ** 2, axis=-1))
    d_an = jnp.sqrt(jnp.sum((a - n + EPS) ** 2, axis=-1))
    t = jnp.sum(jnp.mean(jnp.maximum(d_ap - d_an + MARGIN, 0.0), axis=-1))
    return (1.0 - ALPHA) * c + ALPHA * t


if __name__ == "__main__":
    def make_inputs(key, B, C, D):
        k1, k2, k3 = jax.random.split(key, 3)
        cl = jax.random.normal(k1, (3, 4, B, C), dtype=jnp.float32)
        tg = jax.random.randint(k2, (3, B), 0, C, dtype=jnp.int32)
        ft = jax.random.normal(k3, (3, 4, B, D), dtype=jnp.float32)
        return cl, tg, ft

    def check(name, got, want, rtol=1e-5, atol=1e-5):
        got = float(np.asarray(got).reshape(-1)[0])
        want = float(np.asarray(want))
        assert np.allclose(got, want, rtol=rtol, atol=atol), \
            f"{name}: pallas={got} ref={want}"

    key = jax.random.PRNGKey(0)
    ka, kb, kc = jax.random.split(key, 3)

    # A) module-scale small shapes -> lane-dense layout, single block, grid (1, 1)
    cl, tg, ft = make_inputs(ka, 64, 16, 32)
    out = jax.block_until_ready(triplet_reid_loss(cl, tg, ft))
    check("small/lane-dense", out, reference_loss(cl, tg, ft))

    # B) lane-dense layout with the parallel batch split + accumulation: grid (2, 2)
    cl, tg, ft = make_inputs(kb, 512, 16, 32)
    out = jax.block_until_ready(triplet_reid_loss(cl, tg, ft, batch_tile=128))
    check("lane-dense/split+acc", out, reference_loss(cl, tg, ft))

    # C) class/feature dims >= 128 -> row layout, split + multi-step pipeline: grid (2, 4)
    cl, tg, ft = make_inputs(kc, 128, 128, 128)
    out = jax.block_until_ready(triplet_reid_loss(cl, tg, ft, batch_tile=16))
    check("row-layout/split+acc", out, reference_loss(cl, tg, ft))

    # D) optional bf16 streaming (v5e/v6e bandwidth win); reference on bf16-rounded inputs
    out = jax.block_until_ready(
        triplet_reid_loss(cl, tg, ft, batch_tile=16, stream_dtype=jnp.bfloat16))
    ref = reference_loss(cl.astype(jnp.bfloat16).astype(jnp.float32), tg,
                         ft.astype(jnp.bfloat16).astype(jnp.float32))
    check("bf16-streaming", out, ref)

    print("KERNEL_OK")
</pallas_src>

<mosaic_0001>
module attributes {stable_mosaic.version = 11 : i64} {
  func.func @_triplet_reid_loss_kernel(%arg0: i32, %arg1: i32, %arg2: memref<12x16x64xf32, #tpu.memory_space<vmem>>, %arg3: memref<3x1x64xi32, #tpu.memory_space<vmem>>, %arg4: memref<12x32x64xf32, #tpu.memory_space<vmem>>, %arg5: memref<1x8x128xf32, #tpu.memory_space<vmem>>, %arg6: memref<12x1xf32, #tpu.memory_space<vmem>>, %arg7: memref<4x1xf32, #tpu.memory_space<vmem>>) attributes {dimension_semantics = [#tpu.dimension_semantics<parallel>, #tpu.dimension_semantics<arbitrary>], iteration_bounds = array<i64: 1, 1>, scalar_prefetch = 0 : i64, scratch_operands = 2 : i64, tpu.core_type = #tpu.core_type<tc>, window_params = [{transform_indices = @transform_0, window_bounds = array<i64: 12, 16, 64>}, {transform_indices = @transform_1, window_bounds = array<i64: 3, 1, 64>}, {transform_indices = @transform_2, window_bounds = array<i64: 12, 32, 64>}, {transform_indices = @transform_3, window_bounds = array<i64: 1, 8, 128>}]} {
    %c0_i32 = arith.constant 0 : i32
    %0 = arith.cmpi eq, %arg1, %c0_i32 : i32
    %1 = arith.extui %0 : i1 to i32
    %c0_i32_0 = arith.constant 0 : i32
    %2 = arith.cmpi ne, %1, %c0_i32_0 : i32
    scf.if %2 {
      %cst_30 = arith.constant 0.000000e+00 : f32
      %65 = vector.broadcast %cst_30 : f32 to vector<12x1xf32>
      %c0_31 = arith.constant 0 : index
      %c0_32 = arith.constant 0 : index
      %66 = vector.load %arg6[%c0_31, %c0_32] : memref<12x1xf32, #tpu.memory_space<vmem>>, vector<12x1xf32>
      tpu.vector_store %arg6[%c0_31, %c0_32], %65 {strides = array<i32>} : memref<12x1xf32, #tpu.memory_space<vmem>>, vector<12x1xf32>,
      %cst_33 = arith.constant 0.000000e+00 : f32
      %67 = vector.broadcast %cst_33 : f32 to vector<4x1xf32>
      %c0_34 = arith.constant 0 : index
      %c0_35 = arith.constant 0 : index
      %68 = vector.load %arg7[%c0_34, %c0_35] : memref<4x1xf32, #tpu.memory_space<vmem>>, vector<4x1xf32>
      tpu.vector_store %arg7[%c0_34, %c0_35], %67 {strides = array<i32>} : memref<4x1xf32, #tpu.memory_space<vmem>>, vector<4x1xf32>,
    } else {
    }
    %c0 = arith.constant 0 : index
    %c0_1 = arith.constant 0 : index
    %c0_2 = arith.constant 0 : index
    %3 = vector.load %arg2[%c0, %c0_1, %c0_2] : memref<12x16x64xf32, #tpu.memory_space<vmem>>, vector<12x16x64xf32>
    %c0_3 = arith.constant 0 : index
    %c0_4 = arith.constant 0 : index
    %c0_5 = arith.constant 0 : index
    %4 = vector.load %arg4[%c0_3, %c0_4, %c0_5] : memref<12x32x64xf32, #tpu.memory_space<vmem>>, vector<12x32x64xf32>
    %c0_6 = arith.constant 0 : index
    %c0_7 = arith.constant 0 : index
    %c0_8 = arith.constant 0 : index
    %5 = vector.load %arg3[%c0_6, %c0_7, %c0_8] : memref<3x1x64xi32, #tpu.memory_space<vmem>>, vector<3x1x64xi32>
    %6 = vector.shape_cast %3 : vector<12x16x64xf32> to vector<3x4x16x64xf32>
    %cst = arith.constant dense<0xFF800000> : vector<3x4x64xf32>
    %7 = vector.multi_reduction <maximumf>, %6, %cst [2] : vector<3x4x16x64xf32> to vector<3x4x64xf32>
    %8 = vector.shape_cast %7 : vector<3x4x64xf32> to vector<3x4x1x64xf32>
    %9 = vector.broadcast %8 : vector<3x4x1x64xf32> to vector<3x4x16x64xf32>
    %10 = arith.subf %6, %9 : vector<3x4x16x64xf32>
    %11 = math.exp %10 : vector<3x4x16x64xf32>
    %cst_9 = arith.constant dense<0.000000e+00> : vector<3x4x64xf32>
    %12 = vector.multi_reduction <add>, %11, %cst_9 [2] : vector<3x4x16x64xf32> to vector<3x4x64xf32>
    %13 = vector.shape_cast %12 : vector<3x4x64xf32> to vector<3x4x1x64xf32>
    %14 = math.log %13 : vector<3x4x1x64xf32>
    %15 = arith.addf %8, %14 : vector<3x4x1x64xf32>
    %16 = tpu.iota {dimensions = array<i32: 2>} : vector<1x1x16x64xi32>
    %17 = vector.shape_cast %5 : vector<3x1x64xi32> to vector<3x1x1x64xi32>
    %18 = vector.broadcast %16 : vector<1x1x16x64xi32> to vector<3x1x16x64xi32>
    %19 = vector.broadcast %17 : vector<3x1x1x64xi32> to vector<3x1x16x64xi32>
    %20 = arith.cmpi eq, %18, %19 : vector<3x1x16x64xi32>
    %cst_10 = arith.constant 0.000000e+00 : f32
    %21 = vector.shape_cast %20 : vector<3x1x16x64xi1> to vector<3x1x16x64xi1>
    %22 = vector.broadcast %21 : vector<3x1x16x64xi1> to vector<3x4x16x64xi1>
    %23 = vector.broadcast %cst_10 : f32 to vector<3x4x16x64xf32>
    %24 = arith.select %22, %6, %23 : vector<3x4x16x64xi1>, vector<3x4x16x64xf32>
    %cst_11 = arith.constant dense<0.000000e+00> : vector<3x4x64xf32>
    %25 = vector.multi_reduction <add>, %24, %cst_11 [2] : vector<3x4x16x64xf32> to vector<3x4x64xf32>
    %26 = vector.shape_cast %25 : vector<3x4x64xf32> to vector<3x4x1x64xf32>
    %27 = arith.subf %15, %26 : vector<3x4x1x64xf32>
    %c0_12 = arith.constant 0 : index
    %c0_13 = arith.constant 0 : index
    %28 = vector.load %arg6[%c0_12, %c0_13] : memref<12x1xf32, #tpu.memory_space<vmem>>, vector<12x1xf32>
    %cst_14 = arith.constant dense<0.000000e+00> : vector<3x4x1xf32>
    %29 = vector.multi_reduction <add>, %27, %cst_14 [3] : vector<3x4x1x64xf32> to vector<3x4x1xf32>
    %30 = vector.shape_cast %29 : vector<3x4x1xf32> to vector<3x4x1x1xf32>
    %31 = vector.shape_cast %30 : vector<3x4x1x1xf32> to vector<12x1xf32>
    %32 = arith.addf %28, %31 : vector<12x1xf32>
    %c0_15 = arith.constant 0 : index
    %c0_16 = arith.constant 0 : index
    %33 = vector.load %arg6[%c0_15, %c0_16] : memref<12x1xf32, #tpu.memory_space<vmem>>, vector<12x1xf32>
    tpu.vector_store %arg6[%c0_15, %c0_16], %32 {strides = array<i32>} : memref<12x1xf32, #tpu.memory_space<vmem>>, vector<12x1xf32>,
    %34 = vector.extract_strided_slice %4 {offsets = [0, 0, 0], sizes = [4, 32, 64], strides = [1, 1, 1]} : vector<12x32x64xf32> to vector<4x32x64xf32>
    %35 = vector.extract_strided_slice %4 {offsets = [4, 0, 0], sizes = [4, 32, 64], strides = [1, 1, 1]} : vector<12x32x64xf32> to vector<4x32x64xf32>
    %36 = vector.extract_strided_slice %4 {offsets = [8, 0, 0], sizes = [4, 32, 64], strides = [1, 1, 1]} : vector<12x32x64xf32> to vector<4x32x64xf32>
    %37 = arith.subf %34, %35 : vector<4x32x64xf32>
    %cst_17 = arith.constant 9.99999997E-7 : f32
    %38 = vector.broadcast %cst_17 : f32 to vector<4x32x64xf32>
    %39 = arith.addf %37, %38 : vector<4x32x64xf32>
    %40 = arith.subf %34, %36 : vector<4x32x64xf32>
    %cst_18 = arith.constant 9.99999997E-7 : f32
    %41 = vector.broadcast %cst_18 : f32 to vector<4x32x64xf32>
    %42 = arith.addf %40, %41 : vector<4x32x64xf32>
    %43 = arith.mulf %39, %39 : vector<4x32x64xf32>
    %cst_19 = arith.constant dense<0.000000e+00> : vector<4x64xf32>
    %44 = vector.multi_reduction <add>, %43, %cst_19 [1] : vector<4x32x64xf32> to vector<4x64xf32>
    %45 = vector.shape_cast %44 : vector<4x64xf32> to vector<4x1x64xf32>
    %46 = math.sqrt %45 : vector<4x1x64xf32>
    %47 = arith.mulf %42, %42 : vector<4x32x64xf32>
    %cst_20 = arith.constant dense<0.000000e+00> : vector<4x64xf32>
    %48 = vector.multi_reduction <add>, %47, %cst_20 [1] : vector<4x32x64xf32> to vector<4x64xf32>
    %49 = vector.shape_cast %48 : vector<4x64xf32> to vector<4x1x64xf32>
    %50 = math.sqrt %49 : vector<4x1x64xf32>
    %51 = arith.subf %46, %50 : vector<4x1x64xf32>
    %cst_21 = arith.constant 1.000000e+00 : f32
    %52 = vector.broadcast %cst_21 : f32 to vector<4x1x64xf32>
    %53 = arith.addf %51, %52 : vector<4x1x64xf32>
    %cst_22 = arith.constant 0.000000e+00 : f32
    %54 = vector.broadcast %cst_22 : f32 to vector<4x1x64xf32>
    %55 = arith.maximumf %53, %54 : vector<4x1x64xf32>
    %c0_23 = arith.constant 0 : index
    %c0_24 = arith.constant 0 : index
    %56 = vector.load %arg7[%c0_23, %c0_24] : memref<4x1xf32, #tpu.memory_space<vmem>>, vector<4x1xf32>
    %cst_25 = arith.constant dense<0.000000e+00> : vector<4x1xf32>
    %57 = vector.multi_reduction <add>, %55, %cst_25 [2] : vector<4x1x64xf32> to vector<4x1xf32>
    %58 = vector.shape_cast %57 : vector<4x1xf32> to vector<4x1x1xf32>
    %59 = vector.shape_cast %58 : vector<4x1x1xf32> to vector<4x1xf32>
    %60 = arith.addf %56, %59 : vector<4x1xf32>
    %c0_26 = arith.constant 0 : index
    %c0_27 = arith.constant 0 : index
    %61 = vector.load %arg7[%c0_26, %c0_27] : memref<4x1xf32, #tpu.memory_space<vmem>>, vector<4x1xf32>
    tpu.vector_store %arg7[%c0_26, %c0_27], %60 {strides = array<i32>} : memref<4x1xf32, #tpu.memory_space<vmem>>, vector<4x1xf32>,
    %c0_i32_28 = arith.constant 0 : i32
    %62 = arith.cmpi eq, %arg1, %c0_i32_28 : i32
    %63 = arith.extui %62 : i1 to i32
    %c0_i32_29 = arith.constant 0 : i32
    %64 = arith.cmpi ne, %63, %c0_i32_29 : i32
    scf.if %64 {
      %c0_30 = arith.constant 0 : index
      %c0_31 = arith.constant 0 : index
      %65 = vector.load %arg6[%c0_30, %c0_31] : memref<12x1xf32, #tpu.memory_space<vmem>>, vector<12x1xf32>
      %66 = vector.shape_cast %65 : vector<12x1xf32> to vector<1x12x1xf32>
      %cst_32 = arith.constant dense<0.000000e+00> : vector<1xf32>
      %67 = vector.multi_reduction <add>, %66, %cst_32 [1, 2] : vector<1x12x1xf32> to vector<1xf32>
      %68 = vector.shape_cast %67 : vector<1xf32> to vector<1x1x1xf32>
      %69 = vector.extract %68[0, 0, 0] : f32 from vector<1x1x1xf32>
      %cst_33 = arith.constant 2.6041668E-4 : f32
      %70 = arith.mulf %cst_33, %69 : f32
      %c0_34 = arith.constant 0 : index
      %c0_35 = arith.constant 0 : index
      %71 = vector.load %arg7[%c0_34, %c0_35] : memref<4x1xf32, #tpu.memory_space<vmem>>, vector<4x1xf32>
      %72 = vector.shape_cast %71 : vector<4x1xf32> to vector<1x4x1xf32>
      %cst_36 = arith.constant dense<0.000000e+00> : vector<1xf32>
      %73 = vector.multi_reduction <add>, %72, %cst_36 [1, 2] : vector<1x4x1xf32> to vector<1xf32>
      %74 = vector.shape_cast %73 : vector<1xf32> to vector<1x1x1xf32>
      %75 = vector.extract %74[0, 0, 0] : f32 from vector<1x1x1xf32>
      %cst_37 = arith.constant 0.0148437498 : f32
      %76 = arith.mulf %cst_37, %75 : f32
      %77 = arith.addf %70, %76 : f32
      %78 = vector.broadcast %77 : f32 to vector<1x8x128xf32>
      %c0_38 = arith.constant 0 : index
      %c0_39 = arith.constant 0 : index
      %c0_40 = arith.constant 0 : index
      %79 = vector.load %arg5[%c0_38, %c0_39, %c0_40] : memref<1x8x128xf32, #tpu.memory_space<vmem>>, vector<1x8x128xf32>
      tpu.vector_store %arg5[%c0_38, %c0_39, %c0_40], %78 {strides = array<i32>} : memref<1x8x128xf32, #tpu.memory_space<vmem>>, vector<1x8x128xf32>,
    } else {
    }
    return
  }
  func.func @transform_0(%arg0: i32, %arg1: i32) -> (i32, i32, i32) {
    %c1_i32 = arith.constant 1 : i32
    %0 = arith.muli %arg0, %c1_i32 : i32
    %1 = arith.addi %0, %arg1 : i32
    %c0_i32 = arith.constant 0 : i32
    %c0_i32_0 = arith.constant 0 : i32
    %c0_i32_1 = arith.constant 0 : i32
    return %c0_i32, %c0_i32_0, %1 : i32, i32, i32
  }
  func.func @transform_1(%arg0: i32, %arg1: i32) -> (i32, i32, i32) {
    %c1_i32 = arith.constant 1 : i32
    %0 = arith.muli %arg0, %c1_i32 : i32
    %1 = arith.addi %0, %arg1 : i32
    %c0_i32 = arith.constant 0 : i32
    %c0_i32_0 = arith.constant 0 : i32
    %c0_i32_1 = arith.constant 0 : i32
    return %c0_i32, %c0_i32_0, %1 : i32, i32, i32
  }
  func.func @transform_2(%arg0: i32, %arg1: i32) -> (i32, i32, i32) {
    %c1_i32 = arith.constant 1 : i32
    %0 = arith.muli %arg0, %c1_i32 : i32
    %1 = arith.addi %0, %arg1 : i32
    %c0_i32 = arith.constant 0 : i32
    %c0_i32_0 = arith.constant 0 : i32
    %c0_i32_1 = arith.constant 0 : i32
    return %c0_i32, %c0_i32_0, %1 : i32, i32, i32
  }
  func.func @transform_3(%arg0: i32, %arg1: i32) -> (i32, i32, i32) {
    %c0_i32 = arith.constant 0 : i32
    %c0_i32_0 = arith.constant 0 : i32
    %c0_i32_1 = arith.constant 0 : i32
    return %arg0, %c0_i32, %c0_i32_0 : i32, i32, i32
  }
}

</mosaic_0001>

<llo_original>
// kernel: tpu_custom_call.1
$region0: #{tpu_custom_call.1}
  #allocation0 [shape = 'u32[]', space=smem, size = 0x4, offset = 0x4, fixed_abs, tag = 'smem constant byte address 0x4 - core index']
  #allocation1 [shape = 'u32[144,128]{1,0:T(1,128)}', space=vmem, size = 0x12000, scoped, tag = 'internal scratch']
  #allocation2 [shape = 'f32[12,1]{1,0:T(8,128)}', space=vmem, size = 0x2000, scoped, tag = 'scratch operand']
  #allocation3 [shape = 'f32[4,1]{1,0:T(4,128)}', space=vmem, size = 0x800, scoped, tag = 'scratch operand']
  %s0 = inlined_call_operand.hbm [shape: f32[12,16,64], index: 0, kind: input, shape index: {}]
  %s1 = inlined_call_operand.vmem [shape: s32[3,1,64], index: 1, kind: input, shape index: {}]
  %s2 = inlined_call_operand.hbm [shape: f32[12,32,64], index: 2, kind: input, shape index: {}]
  %s3 = inlined_call_operand.hbm [shape: f32[1,8,128], index: 3, kind: output, shape index: {}]
  %s4 = sld [smem:[#allocation0]]
  $region38: #{tpu_custom_call.1} parent=0
    _
  %s6 = ssub.s32 1, %s4
  %s7 = scalar_select 0, %s6, %s4
  $region1: #{tpu_custom_call.1} parent=0
    #allocation4 [shape = 'u8[98304]{0}', space=vmem, size = 0x18000, scoped, tag = 'input window, operand 0, single buffered']
    #allocation5 [shape = 's32[1]{0}', space=sflag, size = 0x4, scoped, tag = 'scoped memory for tpu_custom_call.1']
    #allocation6 [shape = 's32[1]{0}', space=sflag, size = 0x4, scoped, tag = 'scoped memory for tpu_custom_call.1']
    #allocation7 [shape = 'u8[196608]{0}', space=vmem, size = 0x30000, scoped, tag = 'input window, operand 2, single buffered']
    #allocation8 [shape = 's32[1]{0}', space=sflag, size = 0x4, scoped, tag = 'scoped memory for tpu_custom_call.1']
    #allocation9 [shape = 'u8[4096]{0}', space=vmem, size = 0x1000, scoped, tag = 'output window, operand 0, single buffered']
    %8 = vsyncpa [#allocation5], 0
    %9 = vsyncpa [#allocation8], 0
    %10 = vsyncpa [#allocation6], 0
    // Predicated region
    $region2: #{tpu_custom_call.1} parent=1 // pred_check
      _
    $region3: #{tpu_custom_call.1} parent=1 // pred_check_branch
      %12 = sbr.rel (0) target = $region5
    $region4: #{tpu_custom_call.1} parent=1 // pred_region
      %s13 = sadd.s32 0, 0
      %s15 = ssub.s32 3072, 3072
      %16 = vsyncadd [#allocation5], %s15
      %s17 = smul.addr %s13, 128
      %s18 = scalar_lea.hbm %s0, %s17
      %s19 = sshll.u32 [#allocation4], 4
      %s20 = int_to_ptr.vmem [resolvable:$true] %s19
      %25 = dma.hbm_to_vmem [thread:$0]  %s18, 3072, %s20, [#allocation5], 128, 128, 8
    $region5: #{tpu_custom_call.1} parent=1 // pred_fallthru
      _
    // Predicated region
    $region6: #{tpu_custom_call.1} parent=1 // pred_check
      _
    $region7: #{tpu_custom_call.1} parent=1 // pred_check_branch
      %27 = sbr.rel (0) target = $region9
    $region8: #{tpu_custom_call.1} parent=1 // pred_region
      %s28 = sadd.s32 0, 0
      %p29 = scmp.lt.s32.totalorder %s28, 0
      %s30 = scalar_select %p29, %s28, 0
      %s31 = scalar_lea.vmem %s1, %s30
      %s32 = sadd.s32 0, 0
    $region9: #{tpu_custom_call.1} parent=1 // pred_fallthru
      _
    // Predicated region
    $region10: #{tpu_custom_call.1} parent=1 // pred_check
      _
    $region11: #{tpu_custom_call.1} parent=1 // pred_check_branch
      %34 = sbr.rel (0) target = $region13
    $region12: #{tpu_custom_call.1} parent=1 // pred_region
      %s35 = sadd.s32 0, 0
      %s37 = ssub.s32 6144, 6144
      %38 = vsyncadd [#allocation8], %s37
      %s39 = smul.addr %s35, 128
      %s40 = scalar_lea.hbm %s2, %s39
      %s41 = sshll.u32 [#allocation7], 4
      %s42 = int_to_ptr.vmem [resolvable:$true] %s41
      %47 = dma.hbm_to_vmem [thread:$0]  %s40, 6144, %s42, [#allocation8], 128, 128, 8
    $region13: #{tpu_custom_call.1} parent=1 // pred_fallthru
      _
    // Predicated region
    $region14: #{tpu_custom_call.1} parent=1 // pred_check
      _
    $region15: #{tpu_custom_call.1} parent=1 // pred_check_branch
      %49 = sbr.rel (0) target = $region17
    $region16: #{tpu_custom_call.1} parent=1 // pred_region
      %50 = dma.done [#allocation5], 3072
    $region17: #{tpu_custom_call.1} parent=1 // pred_fallthru
      _
    // Predicated region
    $region18: #{tpu_custom_call.1} parent=1 // pred_check
      _
    $region19: #{tpu_custom_call.1} parent=1 // pred_check_branch
      %52 = sbr.rel (0) target = $region21
    $region20: #{tpu_custom_call.1} parent=1 // pred_region
      %53 = dma.done [#allocation8], 6144
    $region21: #{tpu_custom_call.1} parent=1 // pred_fallthru
      _
    %s54 = sadd.s32 0, 0
    %p55 = scmp.lt.s32.totalorder %s54, 0
    %s56 = scalar_select %p55, %s54, 0
    %s57 = scalar_lea.vmem %s1, %s56
    %s58 = sadd.s32 0, 0
    %s59 = sadd.s32 0, 0
    %p60 = scmp.lt.s32.totalorder %s59, 0
    %s61 = scalar_select %p60, %s59, 0
    %s62 = scalar_lea.vmem %s1, %s61
    %s63 = sadd.s32 0, 0
    %s64 = sadd.s32 0, 0
    %p65 = scmp.eq.s32.totalorder 0, 0
    // Predicated region
    $region22: #{tpu_custom_call.1} parent=1 // pred_check
      %p66 = pneg %p65
    $region23: #{tpu_custom_call.1} parent=1 // pred_check_branch
      %68 = sbr.rel (%p66) target = $region25
    $region24: #{tpu_custom_call.1} parent=1 // pred_region
      %vm69 = vcmask 7168
      %70 = vst.msk [vmem:[#allocation2] sm:$0xff] %vm69, 0.0
      %vm71 = vcmask 3072
      %72 = vst.msk [vmem:[#allocation2 + $0x8] sm:$0xf] %vm71, 0.0
      %73 = vst.msk [vmem:[#allocation3] sm:$0xf] %vm71, 0.0
    $region25: #{tpu_custom_call.1} parent=1 // pred_fallthru
      _
    %v74 = vld [vmem:[#allocation4] sm:$0xff]
    %v75 = vld [vmem:[#allocation4 + $0x8] sm:$0xff]
    %v76 = vld [vmem:[#allocation4 + $0x10] sm:$0xff]
    %v77 = vld [vmem:[#allocation4 + $0x18] sm:$0xff]
    %v78 = vld [vmem:[#allocation4 + $0x20] sm:$0xff]
    %v79 = vld [vmem:[#allocation4 + $0x28] sm:$0xff]
    %v80 = vld [vmem:[#allocation4 + $0x30] sm:$0xff]
    %v81 = vld [vmem:[#allocation4 + $0x38] sm:$0xff]
    %v82 = vld [vmem:[#allocation4 + $0x40] sm:$0xff]
    %v83 = vld [vmem:[#allocation4 + $0x48] sm:$0xff]
    %v84 = vld [vmem:[#allocation4 + $0x50] sm:$0xff]
    %v85 = vld [vmem:[#allocation4 + $0x58] sm:$0xff]
    %v86 = vld [vmem:[#allocation4 + $0x60] sm:$0xff]
    %v87 = vld [vmem:[#allocation4 + $0x68] sm:$0xff]
    %v88 = vld [vmem:[#allocation4 + $0x70] sm:$0xff]
    %v89 = vld [vmem:[#allocation4 + $0x78] sm:$0xff]
    %v90 = vld [vmem:[#allocation4 + $0x80] sm:$0xff]
    %v91 = vld [vmem:[#allocation4 + $0x88] sm:$0xff]
    %v92 = vld [vmem:[#allocation4 + $0x90] sm:$0xff]
    %v93 = vld [vmem:[#allocation4 + $0x98] sm:$0xff]
    %v94 = vld [vmem:[#allocation4 + $0xa0] sm:$0xff]
    %v95 = vld [vmem:[#allocation4 + $0xa8] sm:$0xff]
    %v96 = vld [vmem:[#allocation4 + $0xb0] sm:$0xff]
    %v97 = vld [vmem:[#allocation4 + $0xb8] sm:$0xff]
    %v98 = vld [vmem:[#allocation7] sm:$0xff]
    %v99 = vld [vmem:[#allocation7 + $0x8] sm:$0xff]
    %v100 = vld [vmem:[#allocation7 + $0x10] sm:$0xff]
    %v101 = vld [vmem:[#allocation7 + $0x18] sm:$0xff]
    %v102 = vld [vmem:[#allocation7 + $0x20] sm:$0xff]
    %v103 = vld [vmem:[#allocation7 + $0x28] sm:$0xff]
    %v104 = vld [vmem:[#allocation7 + $0x30] sm:$0xff]
    %v105 = vld [vmem:[#allocation7 + $0x38] sm:$0xff]
    %v106 = vld [vmem:[#allocation7 + $0x40] sm:$0xff]
    %v107 = vld [vmem:[#allocation7 + $0x48] sm:$0xff]
    %v108 = vld [vmem:[#allocation7 + $0x50] sm:$0xff]
    %v109 = vld [vmem:[#allocation7 + $0x58] sm:$0xff]
    %v110 = vld [vmem:[#allocation7 + $0x60] sm:$0xff]
    %v111 = vld [vmem:[#allocation7 + $0x68] sm:$0xff]
    %v112 = vld [vmem:[#allocation7 + $0x70] sm:$0xff]
    %v113 = vld [vmem:[#allocation7 + $0x78] sm:$0xff]
    %v114 = vld [vmem:[#allocation7 + $0x80] sm:$0xff]
    %v115 = vld [vmem:[#allocation7 + $0x88] sm:$0xff]
    %v116 = vld [vmem:[#allocation7 + $0x90] sm:$0xff]
    %v117 = vld [vmem:[#allocation7 + $0x98] sm:$0xff]
    %v118 = vld [vmem:[#allocation7 + $0xa0] sm:$0xff]
    %v119 = vld [vmem:[#allocation7 + $0xa8] sm:$0xff]
    %v120 = vld [vmem:[#allocation7 + $0xb0] sm:$0xff]
    %v121 = vld [vmem:[#allocation7 + $0xb8] sm:$0xff]
    %v122 = vld [vmem:[#allocation7 + $0xc0] sm:$0xff]
    %v123 = vld [vmem:[#allocation7 + $0xc8] sm:$0xff]
    %v124 = vld [vmem:[#allocation7 + $0xd0] sm:$0xff]
    %v125 = vld [vmem:[#allocation7 + $0xd8] sm:$0xff]
    %v126 = vld [vmem:[#allocation7 + $0xe0] sm:$0xff]
    %v127 = vld [vmem:[#allocation7 + $0xe8] sm:$0xff]
    %v128 = vld [vmem:[#allocation7 + $0xf0] sm:$0xff]
    %v129 = vld [vmem:[#allocation7 + $0xf8] sm:$0xff]
    %v130 = vld [vmem:[#allocation7 + $0x100] sm:$0xff]
    %v131 = vld [vmem:[#allocation7 + $0x108] sm:$0xff]
    %v132 = vld [vmem:[#allocation7 + $0x110] sm:$0xff]
    %v133 = vld [vmem:[#allocation7 + $0x118] sm:$0xff]
    %v134 = vld [vmem:[#allocation7 + $0x120] sm:$0xff]
    %v135 = vld [vmem:[#allocation7 + $0x128] sm:$0xff]
    %v136 = vld [vmem:[#allocation7 + $0x130] sm:$0xff]
    %v137 = vld [vmem:[#allocation7 + $0x138] sm:$0xff]
    %v138 = vld [vmem:[#allocation7 + $0x140] sm:$0xff]
    %v139 = vld [vmem:[#allocation7 + $0x148] sm:$0xff]
    %v140 = vld [vmem:[#allocation7 + $0x150] sm:$0xff]
    %v141 = vld [vmem:[#allocation7 + $0x158] sm:$0xff]
    %v142 = vld [vmem:[#allocation7 + $0x160] sm:$0xff]
    %v143 = vld [vmem:[#allocation7 + $0x168] sm:$0xff]
    %v144 = vld [vmem:[#allocation7 + $0x170] sm:$0xff]
    %v145 = vld [vmem:[#allocation7 + $0x178] sm:$0xff]
    %v146 = vld [vmem:[%s62] sm:$0x1]
    %v147 = vld [vmem:[%s62 + $0x1] sm:$0x1]
    %v148 = vld [vmem:[%s62 + $0x2] sm:$0x1]
    %vm149 = vcmask 523264
    %v150 = vsel %vm149, %v74, -inf
    %v151 = vsel %vm149, %v75, -inf
    %v152 = vmax.f32 %v150, %v151
    %v153 = vrot.slane %v152, 4
    %v154 = vmax.f32 %v152, %v153
    %v155 = vrot.slane %v154, 2
    %v156 = vmax.f32 %v154, %v155
    %v157 = vrot.slane %v156, 1
    %v158 = vmax.f32 %v156, %v157
    %v159 = vsel %vm149, %v76, -inf
    %v160 = vsel %vm149, %v77, -inf
    %v161 = vmax.f32 %v159, %v160
    %v162 = vrot.slane %v161, 4
    %v163 = vmax.f32 %v161, %v162
    %v164 = vrot.slane %v163, 2
    %v165 = vmax.f32 %v163, %v164
    %v166 = vrot.slane %v165, 1
    %v167 = vmax.f32 %v165, %v166
    %v168 = vsel %vm149, %v78, -inf
    %v169 = vsel %vm149, %v79, -inf
    %v170 = vmax.f32 %v168, %v169
    %v171 = vrot.slane %v170, 4
    %v172 = vmax.f32 %v170, %v171
    %v173 = vrot.slane %v172, 2
    %v174 = vmax.f32 %v172, %v173
    %v175 = vrot.slane %v174, 1
    %v176 = vmax.f32 %v174, %v175
    %v177 = vsel %vm149, %v80, -inf
    %v178 = vsel %vm149, %v81, -inf
    %v179 = vmax.f32 %v177, %v178
    %v180 = vrot.slane %v179, 4
    %v181 = vmax.f32 %v179, %v180
    %v182 = vrot.slane %v181, 2
    %v183 = vmax.f32 %v181, %v182
    %v184 = vrot.slane %v183, 1
    %v185 = vmax.f32 %v183, %v184
    %v186 = vsel %vm149, %v82, -inf
    %v187 = vsel %vm149, %v83, -inf
    %v188 = vmax.f32 %v186, %v187
    %v189 = vrot.slane %v188, 4
    %v190 = vmax.f32 %v188, %v189
    %v191 = vrot.slane %v190, 2
    %v192 = vmax.f32 %v190, %v191
    %v193 = vrot.slane %v192, 1
    %v194 = vmax.f32 %v192, %v193
    %v195 = vsel %vm149, %v84, -inf
    %v196 = vsel %vm149, %v85, -inf
    %v197 = vmax.f32 %v195, %v196
    %v198 = vrot.slane %v197, 4
    %v199 = vmax.f32 %v197, %v198
    %v200 = vrot.slane %v199, 2
    %v201 = vmax.f32 %v199, %v200
    %v202 = vrot.slane %v201, 1
    %v203 = vmax.f32 %v201, %v202
    %v204 = vsel %vm149, %v86, -inf
    %v205 = vsel %vm149, %v87, -inf
    %v206 = vmax.f32 %v204, %v205
    %v207 = vrot.slane %v206, 4
    %v208 = vmax.f32 %v206, %v207
    %v209 = vrot.slane %v208, 2
    %v210 = vmax.f32 %v208, %v209
    %v211 = vrot.slane %v210, 1
    %v212 = vmax.f32 %v210, %v211
    %v213 = vsel %vm149, %v88, -inf
    %v214 = vsel %vm149, %v89, -inf
    %v215 = vmax.f32 %v213, %v214
    %v216 = vrot.slane %v215, 4
    %v217 = vmax.f32 %v215, %v216
    %v218 = vrot.slane %v217, 2
    %v219 = vmax.f32 %v217, %v218
    %v220 = vrot.slane %v219, 1
    %v221 = vmax.f32 %v219, %v220
    %v222 = vsel %vm149, %v90, -inf
    %v223 = vsel %vm149, %v91, -inf
    %v224 = vmax.f32 %v222, %v223
    %v225 = vrot.slane %v224, 4
    %v226 = vmax.f32 %v224, %v225
    %v227 = vrot.slane %v226, 2
    %v228 = vmax.f32 %v226, %v227
    %v229 = vrot.slane %v228, 1
    %v230 = vmax.f32 %v228, %v229
    %v231 = vsel %vm149, %v92, -inf
    %v232 = vsel %vm149, %v93, -inf
    %v233 = vmax.f32 %v231, %v232
    %v234 = vrot.slane %v233, 4
    %v235 = vmax.f32 %v233, %v234
    %v236 = vrot.slane %v235, 2
    %v237 = vmax.f32 %v235, %v236
    %v238 = vrot.slane %v237, 1
    %v239 = vmax.f32 %v237, %v238
    %v240 = vsel %vm149, %v94, -inf
    %v241 = vsel %vm149, %v95, -inf
    %v242 = vmax.f32 %v240, %v241
    %v243 = vrot.slane %v242, 4
    %v244 = vmax.f32 %v242, %v243
    %v245 = vrot.slane %v244, 2
    %v246 = vmax.f32 %v244, %v245
    %v247 = vrot.slane %v246, 1
    %v248 = vmax.f32 %v246, %v247
    %v249 = vsel %vm149, %v96, -inf
    %v250 = vsel %vm149, %v97, -inf
    %v251 = vmax.f32 %v249, %v250
    %v252 = vrot.slane %v251, 4
    %v253 = vmax.f32 %v251, %v252
    %v254 = vrot.slane %v253, 2
    %v255 = vmax.f32 %v253, %v254
    %v256 = vrot.slane %v255, 1
    %v257 = vmax.f32 %v255, %v256
    %v258 = vsub.f32 %v74, %v158
    %v259 = vsub.f32 %v75, %v158
    %v260 = vsub.f32 %v76, %v167
    %v261 = vsub.f32 %v77, %v167
    %v262 = vsub.f32 %v78, %v176
    %v263 = vsub.f32 %v79, %v176
    %v264 = vsub.f32 %v80, %v185
    %v265 = vsub.f32 %v81, %v185
    %v266 = vsub.f32 %v82, %v194
    %v267 = vsub.f32 %v83, %v194
    %v268 = vsub.f32 %v84, %v203
    %v269 = vsub.f32 %v85, %v203
    %v270 = vsub.f32 %v86, %v212
    %v271 = vsub.f32 %v87, %v212
    %v272 = vsub.f32 %v88, %v221
    %v273 = vsub.f32 %v89, %v221
    %v274 = vsub.f32 %v90, %v230
    %v275 = vsub.f32 %v91, %v230
    %v276 = vsub.f32 %v92, %v239
    %v277 = vsub.f32 %v93, %v239
    %v278 = vsub.f32 %v94, %v248
    %v279 = vsub.f32 %v95, %v248
    %v280 = vsub.f32 %v96, %v257
    %v281 = vsub.f32 %v97, %v257
    %v282 = vmul.f32 %v258, 1.442695
    %v283 = vpow.pop %v282
    %v284 = vmul.f32 %v259, 1.442695
    %v285 = vpow.pop %v284
    %v286 = vmul.f32 %v260, 1.442695
    %v287 = vpow.pop %v286
    %v288 = vmul.f32 %v261, 1.442695
    %v289 = vpow.pop %v288
    %v290 = vmul.f32 %v262, 1.442695
    %v291 = vpow.pop %v290
    %v292 = vmul.f32 %v263, 1.442695
    %v293 = vpow.pop %v292
    %v294 = vmul.f32 %v264, 1.442695
    %v295 = vpow.pop %v294
    %v296 = vmul.f32 %v265, 1.442695
    %v297 = vpow.pop %v296
    %v298 = vmul.f32 %v266, 1.442695
    %v299 = vpow.pop %v298
    %v300 = vmul.f32 %v267, 1.442695
    %v301 = vpow.pop %v300
    %v302 = vmul.f32 %v268, 1.442695
    %v303 = vpow.pop %v302
    %v304 = vmul.f32 %v269, 1.442695
    %v305 = vpow.pop %v304
    %v306 = vmul.f32 %v270, 1.442695
    %v307 = vpow.pop %v306
    %v308 = vmul.f32 %v271, 1.442695
    %v309 = vpow.pop %v308
    %v310 = vmul.f32 %v272, 1.442695
    %v311 = vpow.pop %v310
    %v312 = vmul.f32 %v273, 1.442695
    %v313 = vpow.pop %v312
    %v314 = vmul.f32 %v274, 1.442695
    %v315 = vpow.pop %v314
    %v316 = vmul.f32 %v275, 1.442695
    %v317 = vpow.pop %v316
    %v318 = vmul.f32 %v276, 1.442695
    %v319 = vpow.pop %v318
    %v320 = vmul.f32 %v277, 1.442695
    %v321 = vpow.pop %v320
    %v322 = vmul.f32 %v278, 1.442695
    %v323 = vpow.pop %v322
    %v324 = vmul.f32 %v279, 1.442695
    %v325 = vpow.pop %v324
    %v326 = vmul.f32 %v280, 1.442695
    %v327 = vpow.pop %v326
    %v328 = vmul.f32 %v281, 1.442695
    %v329 = vpow.pop %v328
    %v330 = vsel %vm149, %v283, 0.0
    %v331 = vsel %vm149, %v285, 0.0
    %v332 = vadd.f32 %v330, %v331
    %v333 = vrot.slane %v332, 4
    %v334 = vadd.f32 %v332, %v333
    %v335 = vrot.slane %v334, 2
    %v336 = vadd.f32 %v334, %v335
    %v337 = vrot.slane %v336, 1
    %v338 = vadd.f32 %v336, %v337
    %v339 = vsel %vm149, %v287, 0.0
    %v340 = vsel %vm149, %v289, 0.0
    %v341 = vadd.f32 %v339, %v340
    %v342 = vrot.slane %v341, 4
    %v343 = vadd.f32 %v341, %v342
    %v344 = vrot.slane %v343, 2
    %v345 = vadd.f32 %v343, %v344
    %v346 = vrot.slane %v345, 1
    %v347 = vadd.f32 %v345, %v346
    %v348 = vsel %vm149, %v291, 0.0
    %v349 = vsel %vm149, %v293, 0.0
    %v350 = vadd.f32 %v348, %v349
    %v351 = vrot.slane %v350, 4
    %v352 = vadd.f32 %v350, %v351
    %v353 = vrot.slane %v352, 2
    %v354 = vadd.f32 %v352, %v353
    %v355 = vrot.slane %v354, 1
    %v356 = vadd.f32 %v354, %v355
    %v357 = vsel %vm149, %v295, 0.0
    %v358 = vsel %vm149, %v297, 0.0
    %v359 = vadd.f32 %v357, %v358
    %v360 = vrot.slane %v359, 4
    %v361 = vadd.f32 %v359, %v360
    %v362 = vrot.slane %v361, 2
    %v363 = vadd.f32 %v361, %v362
    %v364 = vrot.slane %v363, 1
    %v365 = vadd.f32 %v363, %v364
    %v366 = vsel %vm149, %v299, 0.0
    %v367 = vsel %vm149, %v301, 0.0
    %v368 = vadd.f32 %v366, %v367
    %v369 = vrot.slane %v368, 4
    %v370 = vadd.f32 %v368, %v369
    %v371 = vrot.slane %v370, 2
    %v372 = vadd.f32 %v370, %v371
    %v373 = vrot.slane %v372, 1
    %v374 = vadd.f32 %v372, %v373
    %v375 = vsel %vm149, %v303, 0.0
    %v376 = vsel %vm149, %v305, 0.0
    %v377 = vadd.f32 %v375, %v376
    %v378 = vrot.slane %v377, 4
    %v379 = vadd.f32 %v377, %v378
    %v380 = vrot.slane %v379, 2
    %v381 = vadd.f32 %v379, %v380
    %v382 = vrot.slane %v381, 1
    %v383 = vadd.f32 %v381, %v382
    %v384 = vsel %vm149, %v307, 0.0
    %v385 = vsel %vm149, %v309, 0.0
    %v386 = vadd.f32 %v384, %v385
    %v387 = vrot.slane %v386, 4
    %v388 = vadd.f32 %v386, %v387
    %v389 = vrot.slane %v388, 2
    %v390 = vadd.f32 %v388, %v389
    %v391 = vrot.slane %v390, 1
    %v392 = vadd.f32 %v390, %v391
    %v393 = vsel %vm149, %v311, 0.0
    %v394 = vsel %vm149, %v313, 0.0
    %v395 = vadd.f32 %v393, %v394
    %v396 = vrot.slane %v395, 4
    %v397 = vadd.f32 %v395, %v396
    %v398 = vrot.slane %v397, 2
    %v399 = vadd.f32 %v397, %v398
    %v400 = vrot.slane %v399, 1
    %v401 = vadd.f32 %v399, %v400
    %v402 = vsel %vm149, %v315, 0.0
    %v403 = vsel %vm149, %v317, 0.0
    %v404 = vadd.f32 %v402, %v403
    %v405 = vrot.slane %v404, 4
    %v406 = vadd.f32 %v404, %v405
    %v407 = vrot.slane %v406, 2
    %v408 = vadd.f32 %v406, %v407
    %v409 = vrot.slane %v408, 1
    %v410 = vadd.f32 %v408, %v409
    %v411 = vsel %vm149, %v319, 0.0
    %v412 = vsel %vm149, %v321, 0.0
    %v413 = vadd.f32 %v411, %v412
    %v414 = vrot.slane %v413, 4
    %v415 = vadd.f32 %v413, %v414
    %v416 = vrot.slane %v415, 2
    %v417 = vadd.f32 %v415, %v416
    %v418 = vrot.slane %v417, 1
    %v419 = vadd.f32 %v417, %v418
    %v420 = vsel %vm149, %v323, 0.0
    %v421 = vsel %vm149, %v325, 0.0
    %v422 = vadd.f32 %v420, %v421
    %v423 = vrot.slane %v422, 4
    %v424 = vadd.f32 %v422, %v423
    %v425 = vrot.slane %v424, 2
    %v426 = vadd.f32 %v424, %v425
    %v427 = vrot.slane %v426, 1
    %v428 = vadd.f32 %v426, %v427
    %v429 = vsel %vm149, %v327, 0.0
    %v430 = vsel %vm149, %v329, 0.0
    %v431 = vadd.f32 %v429, %v430
    %v432 = vrot.slane %v431, 4
    %v433 = vadd.f32 %v431, %v432
    %v434 = vrot.slane %v433, 2
    %v435 = vadd.f32 %v433, %v434
    %v436 = vrot.slane %v435, 1
    %v437 = vadd.f32 %v435, %v436
    %v438 = vlog2.pop %v338
    %v439 = vmul.f32 %v438, 0.6931472
    %v440 = vlog2.pop %v347
    %v441 = vmul.f32 %v440, 0.6931472
    %v442 = vlog2.pop %v356
    %v443 = vmul.f32 %v442, 0.6931472
    %v444 = vlog2.pop %v365
    %v445 = vmul.f32 %v444, 0.6931472
    %v446 = vlog2.pop %v374
    %v447 = vmul.f32 %v446, 0.6931472
    %v448 = vlog2.pop %v383
    %v449 = vmul.f32 %v448, 0.6931472
    %v450 = vlog2.pop %v392
    %v451 = vmul.f32 %v450, 0.6931472
    %v452 = vlog2.pop %v401
    %v453 = vmul.f32 %v452, 0.6931472
    %v454 = vlog2.pop %v410
    %v455 = vmul.f32 %v454, 0.6931472
    %v456 = vlog2.pop %v419
    %v457 = vmul.f32 %v456, 0.6931472
    %v458 = vlog2.pop %v428
    %v459 = vmul.f32 %v458, 0.6931472
    %v460 = vlog2.pop %v437
    %v461 = vmul.f32 %v460, 0.6931472
    %v462 = vadd.f32 %v158, %v439
    %v463 = vadd.f32 %v167, %v441
    %v464 = vadd.f32 %v176, %v443
    %v465 = vadd.f32 %v185, %v445
    %v466 = vadd.f32 %v194, %v447
    %v467 = vadd.f32 %v203, %v449
    %v468 = vadd.f32 %v212, %v451
    %v469 = vadd.f32 %v221, %v453
    %v470 = vadd.f32 %v230, %v455
    %v471 = vadd.f32 %v239, %v457
    %v472 = vadd.f32 %v248, %v459
    %v473 = vadd.f32 %v257, %v461
    %v474 = vlaneseq
    %v475 = vshrl.u32 %v474, 7
    %v476 = vadd.s32 %v475, 8
    %v477 = vlaneseq
    %v478 = vshrl.u32 %v477, 7
    %v479 = vsub.s32 0, %v478
    %v480 = vrot.slane %v146, %v479
    %v481 = vlaneseq
    %v482 = vshrl.u32 %v481, 7
    %v483 = vsub.s32 0, %v482
    %v484 = vrot.slane %v147, %v483
    %v485 = vlaneseq
    %v486 = vshrl.u32 %v485, 7
    %v487 = vsub.s32 0, %v486
    %v488 = vrot.slane %v148, %v487
    %vm489 = vcmp.eq.s32.totalorder %v475, %v480
    %vm490 = vcmp.eq.s32.totalorder %v476, %v480
    %vm491 = vcmp.eq.s32.totalorder %v475, %v484
    %vm492 = vcmp.eq.s32.totalorder %v476, %v484
    %vm493 = vcmp.eq.s32.totalorder %v475, %v488
    %vm494 = vcmp.eq.s32.totalorder %v476, %v488
    %v495 = vsel %vm489, 1, 0
    %v496 = vsel %vm490, 1, 0
    %v497 = vsel %vm491, 1, 0
    %v498 = vsel %vm492, 1, 0
    %v499 = vsel %vm493, 1, 0
    %v500 = vsel %vm494, 1, 0
    %vm501 = vcmp.eq.s32.totalorder %v495, 1
    %vm502 = vcmp.eq.s32.totalorder %v496, 1
    %vm503 = vcmp.eq.s32.totalorder %v497, 1
    %vm504 = vcmp.eq.s32.totalorder %v498, 1
    %vm505 = vcmp.eq.s32.totalorder %v499, 1
    %vm506 = vcmp.eq.s32.totalorder %v500, 1
    %v507 = vsel %vm501, %v74, 0.0
    %v508 = vsel %vm502, %v75, 0.0
    %v509 = vsel %vm501, %v76, 0.0
    %v510 = vsel %vm502, %v77, 0.0
    %v511 = vsel %vm501, %v78, 0.0
    %v512 = vsel %vm502, %v79, 0.0
    %v513 = vsel %vm501, %v80, 0.0
    %v514 = vsel %vm502, %v81, 0.0
    %v515 = vsel %vm503, %v82, 0.0
    %v516 = vsel %vm504, %v83, 0.0
    %v517 = vsel %vm503, %v84, 0.0
    %v518 = vsel %vm504, %v85, 0.0
    %v519 = vsel %vm503, %v86, 0.0
    %v520 = vsel %vm504, %v87, 0.0
    %v521 = vsel %vm503, %v88, 0.0
    %v522 = vsel %vm504, %v89, 0.0
    %v523 = vsel %vm505, %v90, 0.0
    %v524 = vsel %vm506, %v91, 0.0
    %v525 = vsel %vm505, %v92, 0.0
    %v526 = vsel %vm506, %v93, 0.0
    %v527 = vsel %vm505, %v94, 0.0
    %v528 = vsel %vm506, %v95, 0.0
    %v529 = vsel %vm505, %v96, 0.0
    %v530 = vsel %vm506, %v97, 0.0
    %v531 = vsel %vm149, %v507, 0.0
    %v532 = vsel %vm149, %v508, 0.0
    %v533 = vadd.f32 %v531, %v532
    %v534 = vrot.slane %v533, 4
    %v535 = vadd.f32 %v533, %v534
    %v536 = vrot.slane %v535, 2
    %v537 = vadd.f32 %v535, %v536
    %v538 = vrot.slane %v537, 1
    %v539 = vadd.f32 %v537, %v538
    %v540 = vsel %vm149, %v509, 0.0
    %v541 = vsel %vm149, %v510, 0.0
    %v542 = vadd.f32 %v540, %v541
    %v543 = vrot.slane %v542, 4
    %v544 = vadd.f32 %v542, %v543
    %v545 = vrot.slane %v544, 2
    %v546 = vadd.f32 %v544, %v545
    %v547 = vrot.slane %v546, 1
    %v548 = vadd.f32 %v546, %v547
    %v549 = vsel %vm149, %v511, 0.0
    %v550 = vsel %vm149, %v512, 0.0
    %v551 = vadd.f32 %v549, %v550
    %v552 = vrot.slane %v551, 4
    %v553 = vadd.f32 %v551, %v552
    %v554 = vrot.slane %v553, 2
    %v555 = vadd.f32 %v553, %v554
    %v556 = vrot.slane %v555, 1
    %v557 = vadd.f32 %v555, %v556
    %v558 = vsel %vm149, %v513, 0.0
    %v559 = vsel %vm149, %v514, 0.0
    %v560 = vadd.f32 %v558, %v559
    %v561 = vrot.slane %v560, 4
    %v562 = vadd.f32 %v560, %v561
    %v563 = vrot.slane %v562, 2
    %v564 = vadd.f32 %v562, %v563
    %v565 = vrot.slane %v564, 1
    %v566 = vadd.f32 %v564, %v565
    %v567 = vsel %vm149, %v515, 0.0
    %v568 = vsel %vm149, %v516, 0.0
    %v569 = vadd.f32 %v567, %v568
    %v570 = vrot.slane %v569, 4
    %v571 = vadd.f32 %v569, %v570
    %v572 = vrot.slane %v571, 2
    %v573 = vadd.f32 %v571, %v572
    %v574 = vrot.slane %v573, 1
    %v575 = vadd.f32 %v573, %v574
    %v576 = vsel %vm149, %v517, 0.0
    %v577 = vsel %vm149, %v518, 0.0
    %v578 = vadd.f32 %v576, %v577
    %v579 = vrot.slane %v578, 4
    %v580 = vadd.f32 %v578, %v579
    %v581 = vrot.slane %v580, 2
    %v582 = vadd.f32 %v580, %v581
    %v583 = vrot.slane %v582, 1
    %v584 = vadd.f32 %v582, %v583
    %v585 = vsel %vm149, %v519, 0.0
    %v586 = vsel %vm149, %v520, 0.0
    %v587 = vadd.f32 %v585, %v586
    %v588 = vrot.slane %v587, 4
    %v589 = vadd.f32 %v587, %v588
    %v590 = vrot.slane %v589, 2
    %v591 = vadd.f32 %v589, %v590
    %v592 = vrot.slane %v591, 1
    %v593 = vadd.f32 %v591, %v592
    %v594 = vsel %vm149, %v521, 0.0
    %v595 = vsel %vm149, %v522, 0.0
    %v596 = vadd.f32 %v594, %v595
    %v597 = vrot.slane %v596, 4
    %v598 = vadd.f32 %v596, %v597
    %v599 = vrot.slane %v598, 2
    %v600 = vadd.f32 %v598, %v599
    %v601 = vrot.slane %v600, 1
    %v602 = vadd.f32 %v600, %v601
    %v603 = vsel %vm149, %v523, 0.0
    %v604 = vsel %vm149, %v524, 0.0
    %v605 = vadd.f32 %v603, %v604
    %v606 = vrot.slane %v605, 4
    %v607 = vadd.f32 %v605, %v606
    %v608 = vrot.slane %v607, 2
    %v609 = vadd.f32 %v607, %v608
    %v610 = vrot.slane %v609, 1
    %v611 = vadd.f32 %v609, %v610
    %v612 = vsel %vm149, %v525, 0.0
    %v613 = vsel %vm149, %v526, 0.0
    %v614 = vadd.f32 %v612, %v613
    %v615 = vrot.slane %v614, 4
    %v616 = vadd.f32 %v614, %v615
    %v617 = vrot.slane %v616, 2
    %v618 = vadd.f32 %v616, %v617
    %v619 = vrot.slane %v618, 1
    %v620 = vadd.f32 %v618, %v619
    %v621 = vsel %vm149, %v527, 0.0
    %v622 = vsel %vm149, %v528, 0.0
    %v623 = vadd.f32 %v621, %v622
    %v624 = vrot.slane %v623, 4
    %v625 = vadd.f32 %v623, %v624
    %v626 = vrot.slane %v625, 2
    %v627 = vadd.f32 %v625, %v626
    %v628 = vrot.slane %v627, 1
    %v629 = vadd.f32 %v627, %v628
    %v630 = vsel %vm149, %v529, 0.0
    %v631 = vsel %vm149, %v530, 0.0
    %v632 = vadd.f32 %v630, %v631
    %v633 = vrot.slane %v632, 4
    %v634 = vadd.f32 %v632, %v633
    %v635 = vrot.slane %v634, 2
    %v636 = vadd.f32 %v634, %v635
    %v637 = vrot.slane %v636, 1
    %v638 = vadd.f32 %v636, %v637
    %v639 = vsub.f32 %v462, %v539
    %v640 = vsub.f32 %v463, %v548
    %v641 = vsub.f32 %v464, %v557
    %v642 = vsub.f32 %v465, %v566
    %v643 = vsub.f32 %v466, %v575
    %v644 = vsub.f32 %v467, %v584
    %v645 = vsub.f32 %v468, %v593
    %v646 = vsub.f32 %v469, %v602
    %v647 = vsub.f32 %v470, %v611
    %v648 = vsub.f32 %v471, %v620
    %v649 = vsub.f32 %v472, %v629
    %v650 = vsub.f32 %v473, %v638
    %v651 = vld [vmem:[#allocation2] sm:$0xff]
    %v652 = vld [vmem:[#allocation2 + $0x8] sm:$0xf]
    %v653 = vsel %vm149, %v639, 0.0
    %654 = vadd.xlane.f32.xlu0 %v653
    %v655 = vpop.xlane.xlu0 %654
    %v656 = vsel %vm149, %v640, 0.0
    %657 = vadd.xlane.f32.xlu0 %v656
    %v658 = vpop.xlane.xlu0 %657
    %v659 = vsel %vm149, %v641, 0.0
    %660 = vadd.xlane.f32.xlu0 %v659
    %v661 = vpop.xlane.xlu0 %660
    %v662 = vsel %vm149, %v642, 0.0
    %663 = vadd.xlane.f32.xlu0 %v662
    %v664 = vpop.xlane.xlu0 %663
    %v665 = vsel %vm149, %v643, 0.0
    %666 = vadd.xlane.f32.xlu0 %v665
    %v667 = vpop.xlane.xlu0 %666
    %v668 = vsel %vm149, %v644, 0.0
    %669 = vadd.xlane.f32.xlu0 %v668
    %v670 = vpop.xlane.xlu0 %669
    %v671 = vsel %vm149, %v645, 0.0
    %672 = vadd.xlane.f32.xlu0 %v671
    %v673 = vpop.xlane.xlu0 %672
    %v674 = vsel %vm149, %v646, 0.0
    %675 = vadd.xlane.f32.xlu0 %v674
    %v676 = vpop.xlane.xlu0 %675
    %v677 = vsel %vm149, %v647, 0.0
    %678 = vadd.xlane.f32.xlu0 %v677
    %v679 = vpop.xlane.xlu0 %678
    %v680 = vsel %vm149, %v648, 0.0
    %681 = vadd.xlane.f32.xlu0 %v680
    %v682 = vpop.xlane.xlu0 %681
    %v683 = vsel %vm149, %v649, 0.0
    %684 = vadd.xlane.f32.xlu0 %v683
    %v685 = vpop.xlane.xlu0 %684
    %v686 = vsel %vm149, %v650, 0.0
    %687 = vadd.xlane.f32.xlu0 %v686
    %v688 = vpop.xlane.xlu0 %687
    %vm701 = vcmask 1041409
    %v702 = vsel %vm701, %v658, %v655
    %vm703 = vcmask 1042434
    %v704 = vsel %vm703, %v661, %v702
    %vm705 = vcmask 1043459
    %v706 = vsel %vm705, %v664, %v704
    %vm707 = vcmask 1044484
    %v708 = vsel %vm707, %v667, %v706
    %vm709 = vcmask 1045509
    %v710 = vsel %vm709, %v670, %v708
    %vm711 = vcmask 1046534
    %v712 = vsel %vm711, %v673, %v710
    %vm713 = vcmask 1047559
    %v714 = vsel %vm713, %v676, %v712
    %v715 = vsel %vm701, %v682, %v679
    %v716 = vsel %vm703, %v685, %v715
    %v717 = vsel %vm705, %v688, %v716
    %v720 = vadd.f32 %v651, %v714
    %v721 = vadd.f32 %v652, %v717
    %vm722 = vcmask 7168
    %723 = vst.msk [vmem:[#allocation2] sm:$0xff] %vm722, %v720
    %vm724 = vcmask 3072
    %725 = vst.msk [vmem:[#allocation2 + $0x8] sm:$0xf] %vm724, %v721
    %v726 = vsub.f32 %v98, %v114
    %v727 = vsub.f32 %v99, %v115
    %v728 = vsub.f32 %v100, %v116
    %v729 = vsub.f32 %v101, %v117
    %v730 = vsub.f32 %v102, %v118
    %v731 = vsub.f32 %v103, %v119
    %v732 = vsub.f32 %v104, %v120
    %v733 = vsub.f32 %v105, %v121
    %v734 = vsub.f32 %v106, %v122
    %v735 = vsub.f32 %v107, %v123
    %v736 = vsub.f32 %v108, %v124
    %v737 = vsub.f32 %v109, %v125
    %v738 = vsub.f32 %v110, %v126
    %v739 = vsub.f32 %v111, %v127
    %v740 = vsub.f32 %v112, %v128
    %v741 = vsub.f32 %v113, %v129
    %v742 = vadd.f32 %v726, 1e-06
    %v743 = vadd.f32 %v727, 1e-06
    %v744 = vadd.f32 %v728, 1e-06
    %v745 = vadd.f32 %v729, 1e-06
    %v746 = vadd.f32 %v730, 1e-06
    %v747 = vadd.f32 %v731, 1e-06
    %v748 = vadd.f32 %v732, 1e-06
    %v749 = vadd.f32 %v733, 1e-06
    %v750 = vadd.f32 %v734, 1e-06
    %v751 = vadd.f32 %v735, 1e-06
    %v752 = vadd.f32 %v736, 1e-06
    %v753 = vadd.f32 %v737, 1e-06
    %v754 = vadd.f32 %v738, 1e-06
    %v755 = vadd.f32 %v739, 1e-06
    %v756 = vadd.f32 %v740, 1e-06
    %v757 = vadd.f32 %v741, 1e-06
    %v758 = vsub.f32 %v98, %v130
    %v759 = vsub.f32 %v99, %v131
    %v760 = vsub.f32 %v100, %v132
    %v761 = vsub.f32 %v101, %v133
    %v762 = vsub.f32 %v102, %v134
    %v763 = vsub.f32 %v103, %v135
    %v764 = vsub.f32 %v104, %v136
    %v765 = vsub.f32 %v105, %v137
    %v766 = vsub.f32 %v106, %v138
    %v767 = vsub.f32 %v107, %v139
    %v768 = vsub.f32 %v108, %v140
    %v769 = vsub.f32 %v109, %v141
    %v770 = vsub.f32 %v110, %v142
    %v771 = vsub.f32 %v111, %v143
    %v772 = vsub.f32 %v112, %v144
    %v773 = vsub.f32 %v113, %v145
    %v774 = vadd.f32 %v758, 1e-06
    %v775 = vadd.f32 %v759, 1e-06
    %v776 = vadd.f32 %v760, 1e-06
    %v777 = vadd.f32 %v761, 1e-06
    %v778 = vadd.f32 %v762, 1e-06
    %v779 = vadd.f32 %v763, 1e-06
    %v780 = vadd.f32 %v764, 1e-06
    %v781 = vadd.f32 %v765, 1e-06
    %v782 = vadd.f32 %v766, 1e-06
    %v783 = vadd.f32 %v767, 1e-06
    %v784 = vadd.f32 %v768, 1e-06
    %v785 = vadd.f32 %v769, 1e-06
    %v786 = vadd.f32 %v770, 1e-06
    %v787 = vadd.f32 %v771, 1e-06
    %v788 = vadd.f32 %v772, 1e-06
    %v789 = vadd.f32 %v773, 1e-06
    %v790 = vmul.f32 %v742, %v742
    %v791 = vmul.f32 %v743, %v743
    %v792 = vmul.f32 %v744, %v744
    %v793 = vmul.f32 %v745, %v745
    %v794 = vmul.f32 %v746, %v746
    %v795 = vmul.f32 %v747, %v747
    %v796 = vmul.f32 %v748, %v748
    %v797 = vmul.f32 %v749, %v749
    %v798 = vmul.f32 %v750, %v750
    %v799 = vmul.f32 %v751, %v751
    %v800 = vmul.f32 %v752, %v752
    %v801 = vmul.f32 %v753, %v753
    %v802 = vmul.f32 %v754, %v754
    %v803 = vmul.f32 %v755, %v755
    %v804 = vmul.f32 %v756, %v756
    %v805 = vmul.f32 %v757, %v757
    %v806 = vsel %vm149, %v790, 0.0
    %v807 = vsel %vm149, %v791, 0.0
    %v808 = vadd.f32 %v806, %v807
    %v809 = vsel %vm149, %v792, 0.0
    %v810 = vadd.f32 %v808, %v809
    %v811 = vsel %vm149, %v793, 0.0
    %v812 = vadd.f32 %v810, %v811
    %v813 = vrot.slane %v812, 4
    %v814 = vadd.f32 %v812, %v813
    %v815 = vrot.slane %v814, 2
    %v816 = vadd.f32 %v814, %v815
    %v817 = vrot.slane %v816, 1
    %v818 = vadd.f32 %v816, %v817
    %v819 = vsel %vm149, %v794, 0.0
    %v820 = vsel %vm149, %v795, 0.0
    %v821 = vadd.f32 %v819, %v820
    %v822 = vsel %vm149, %v796, 0.0
    %v823 = vadd.f32 %v821, %v822
    %v824 = vsel %vm149, %v797, 0.0
    %v825 = vadd.f32 %v823, %v824
    %v826 = vrot.slane %v825, 4
    %v827 = vadd.f32 %v825, %v826
    %v828 = vrot.slane %v827, 2
    %v829 = vadd.f32 %v827, %v828
    %v830 = vrot.slane %v829, 1
    %v831 = vadd.f32 %v829, %v830
    %v832 = vsel %vm149, %v798, 0.0
    %v833 = vsel %vm149, %v799, 0.0
    %v834 = vadd.f32 %v832, %v833
    %v835 = vsel %vm149, %v800, 0.0
    %v836 = vadd.f32 %v834, %v835
    %v837 = vsel %vm149, %v801, 0.0
    %v838 = vadd.f32 %v836, %v837
    %v839 = vrot.slane %v838, 4
    %v840 = vadd.f32 %v838, %v839
    %v841 = vrot.slane %v840, 2
    %v842 = vadd.f32 %v840, %v841
    %v843 = vrot.slane %v842, 1
    %v844 = vadd.f32 %v842, %v843
    %v845 = vsel %vm149, %v802, 0.0
    %v846 = vsel %vm149, %v803, 0.0
    %v847 = vadd.f32 %v845, %v846
    %v848 = vsel %vm149, %v804, 0.0
    %v849 = vadd.f32 %v847, %v848
    %v850 = vsel %vm149, %v805, 0.0
    %v851 = vadd.f32 %v849, %v850
    %v852 = vrot.slane %v851, 4
    %v853 = vadd.f32 %v851, %v852
    %v854 = vrot.slane %v853, 2
    %v855 = vadd.f32 %v853, %v854
    %v856 = vrot.slane %v855, 1
    %v857 = vadd.f32 %v855, %v856
    %v858 = vrsqrt.pop %v818
    %v859 = vmul.f32 %v818, %v858
    %vm860 = vcmp.eq.f32.partialorder %v818, inf
    %v861 = vsel %vm860, %v818, %v859
    %vm862 = vcmp.eq.f32.partialorder %v818, 0.0
    %v863 = vand.u32 %v818, 2147483648
    %v864 = vsel %vm862, %v863, %v861
    %v865 = vrsqrt.pop %v831
    %v866 = vmul.f32 %v831, %v865
    %vm867 = vcmp.eq.f32.partialorder %v831, inf
    %v868 = vsel %vm867, %v831, %v866
    %vm869 = vcmp.eq.f32.partialorder %v831, 0.0
    %v870 = vand.u32 %v831, 2147483648
    %v871 = vsel %vm869, %v870, %v868
    %v872 = vrsqrt.pop %v844
    %v873 = vmul.f32 %v844, %v872
    %vm874 = vcmp.eq.f32.partialorder %v844, inf
    %v875 = vsel %vm874, %v844, %v873
    %vm876 = vcmp.eq.f32.partialorder %v844, 0.0
    %v877 = vand.u32 %v844, 2147483648
    %v878 = vsel %vm876, %v877, %v875
    %v879 = vrsqrt.pop %v857
    %v880 = vmul.f32 %v857, %v879
    %vm881 = vcmp.eq.f32.partialorder %v857, inf
    %v882 = vsel %vm881, %v857, %v880
    %vm883 = vcmp.eq.f32.partialorder %v857, 0.0
    %v884 = vand.u32 %v857, 2147483648
    %v885 = vsel %vm883, %v884, %v882
    %v886 = vmul.f32 %v774, %v774
    %v887 = vmul.f32 %v775, %v775
    %v888 = vmul.f32 %v776, %v776
    %v889 = vmul.f32 %v777, %v777
    %v890 = vmul.f32 %v778, %v778
    %v891 = vmul.f32 %v779, %v779
    %v892 = vmul.f32 %v780, %v780
    %v893 = vmul.f32 %v781, %v781
    %v894 = vmul.f32 %v782, %v782
    %v895 = vmul.f32 %v783, %v783
    %v896 = vmul.f32 %v784, %v784
    %v897 = vmul.f32 %v785, %v785
    %v898 = vmul.f32 %v786, %v786
    %v899 = vmul.f32 %v787, %v787
    %v900 = vmul.f32 %v788, %v788
    %v901 = vmul.f32 %v789, %v789
    %v902 = vsel %vm149, %v886, 0.0
    %v903 = vsel %vm149, %v887, 0.0
    %v904 = vadd.f32 %v902, %v903
    %v905 = vsel %vm149, %v888, 0.0
    %v906 = vadd.f32 %v904, %v905
    %v907 = vsel %vm149, %v889, 0.0
    %v908 = vadd.f32 %v906, %v907
    %v909 = vrot.slane %v908, 4
    %v910 = vadd.f32 %v908, %v909
    %v911 = vrot.slane %v910, 2
    %v912 = vadd.f32 %v910, %v911
    %v913 = vrot.slane %v912, 1
    %v914 = vadd.f32 %v912, %v913
    %v915 = vsel %vm149, %v890, 0.0
    %v916 = vsel %vm149, %v891, 0.0
    %v917 = vadd.f32 %v915, %v916
    %v918 = vsel %vm149, %v892, 0.0
    %v919 = vadd.f32 %v917, %v918
    %v920 = vsel %vm149, %v893, 0.0
    %v921 = vadd.f32 %v919, %v920
    %v922 = vrot.slane %v921, 4
    %v923 = vadd.f32 %v921, %v922
    %v924 = vrot.slane %v923, 2
    %v925 = vadd.f32 %v923, %v924
    %v926 = vrot.slane %v925, 1
    %v927 = vadd.f32 %v925, %v926
    %v928 = vsel %vm149, %v894, 0.0
    %v929 = vsel %vm149, %v895, 0.0
    %v930 = vadd.f32 %v928, %v929
    %v931 = vsel %vm149, %v896, 0.0
    %v932 = vadd.f32 %v930, %v931
    %v933 = vsel %vm149, %v897, 0.0
    %v934 = vadd.f32 %v932, %v933
    %v935 = vrot.slane %v934, 4
    %v936 = vadd.f32 %v934, %v935
    %v937 = vrot.slane %v936, 2
    %v938 = vadd.f32 %v936, %v937
    %v939 = vrot.slane %v938, 1
    %v940 = vadd.f32 %v938, %v939
    %v941 = vsel %vm149, %v898, 0.0
    %v942 = vsel %vm149, %v899, 0.0
    %v943 = vadd.f32 %v941, %v942
    %v944 = vsel %vm149, %v900, 0.0
    %v945 = vadd.f32 %v943, %v944
    %v946 = vsel %vm149, %v901, 0.0
    %v947 = vadd.f32 %v945, %v946
    %v948 = vrot.slane %v947, 4
    %v949 = vadd.f32 %v947, %v948
    %v950 = vrot.slane %v949, 2
    %v951 = vadd.f32 %v949, %v950
    %v952 = vrot.slane %v951, 1
    %v953 = vadd.f32 %v951, %v952
    %v954 = vrsqrt.pop %v914
    %v955 = vmul.f32 %v914, %v954
    %vm956 = vcmp.eq.f32.partialorder %v914, inf
    %v957 = vsel %vm956, %v914, %v955
    %vm958 = vcmp.eq.f32.partialorder %v914, 0.0
    %v959 = vand.u32 %v914, 2147483648
    %v960 = vsel %vm958, %v959, %v957
    %v961 = vrsqrt.pop %v927
    %v962 = vmul.f32 %v927, %v961
    %vm963 = vcmp.eq.f32.partialorder %v927, inf
    %v964 = vsel %vm963, %v927, %v962
    %vm965 = vcmp.eq.f32.partialorder %v927, 0.0
    %v966 = vand.u32 %v927, 2147483648
    %v967 = vsel %vm965, %v966, %v964
    %v968 = vrsqrt.pop %v940
    %v969 = vmul.f32 %v940, %v968
    %vm970 = vcmp.eq.f32.partialorder %v940, inf
    %v971 = vsel %vm970, %v940, %v969
    %vm972 = vcmp.eq.f32.partialorder %v940, 0.0
    %v973 = vand.u32 %v940, 2147483648
    %v974 = vsel %vm972, %v973, %v971
    %v975 = vrsqrt.pop %v953
    %v976 = vmul.f32 %v953, %v975
    %vm977 = vcmp.eq.f32.partialorder %v953, inf
    %v978 = vsel %vm977, %v953, %v976
    %vm979 = vcmp.eq.f32.partialorder %v953, 0.0
    %v980 = vand.u32 %v953, 2147483648
    %v981 = vsel %vm979, %v980, %v978
    %v982 = vsub.f32 %v864, %v960
    %v983 = vsub.f32 %v871, %v967
    %v984 = vsub.f32 %v878, %v974
    %v985 = vsub.f32 %v885, %v981
    %v986 = vadd.f32 %v982, 1.0
    %v987 = vadd.f32 %v983, 1.0
    %v988 = vadd.f32 %v984, 1.0
    %v989 = vadd.f32 %v985, 1.0
    %v990 = vmax.f32 %v986, 0.0
    %v991 = vmax.f32 %v987, 0.0
    %v992 = vmax.f32 %v988, 0.0
    %v993 = vmax.f32 %v989, 0.0
    %v994 = vld [vmem:[#allocation3] sm:$0xf]
    %v995 = vsel %vm149, %v990, 0.0
    %996 = vadd.xlane.f32.xlu0 %v995
    %v997 = vpop.xlane.xlu0 %996
    %v998 = vsel %vm149, %v991, 0.0
    %999 = vadd.xlane.f32.xlu0 %v998
    %v1000 = vpop.xlane.xlu0 %999
    %v1001 = vsel %vm149, %v992, 0.0
    %1002 = vadd.xlane.f32.xlu0 %v1001
    %v1003 = vpop.xlane.xlu0 %1002
    %v1004 = vsel %vm149, %v993, 0.0
    %1005 = vadd.xlane.f32.xlu0 %v1004
    %v1006 = vpop.xlane.xlu0 %1005
    %v1011 = vsel %vm701, %v1000, %v997
    %v1012 = vsel %vm703, %v1003, %v1011
    %v1013 = vsel %vm705, %v1006, %v1012
    %v1015 = vadd.f32 %v994, %v1013
    %1016 = vst.msk [vmem:[#allocation3] sm:$0xf] %vm724, %v1015
    // Predicated region
    $region26: #{tpu_custom_call.1} parent=1 // pred_check
      %p1017 = pneg %p65
    $region27: #{tpu_custom_call.1} parent=1 // pred_check_branch
      %1019 = sbr.rel (%p1017) target = $region29
    $region28: #{tpu_custom_call.1} parent=1 // pred_region
      %v1020 = vld [vmem:[#allocation2] sm:$0xff]
      %v1021 = vld [vmem:[#allocation2 + $0x8] sm:$0xf]
      %v1022 = vsel %vm722, %v1020, 0.0
      %v1023 = vsel %vm724, %v1021, 0.0
      %v1024 = vadd.f32 %v1022, %v1023
      %1025 = vadd.xlane.f32.xlu0 %v1024
      %v1026 = vpop.xlane.xlu0 %1025
      %v1027 = vrot.slane %v1026, 4
      %v1028 = vadd.f32 %v1026, %v1027
      %v1029 = vrot.slane %v1028, 2
      %v1030 = vadd.f32 %v1028, %v1029
      %v1031 = vrot.slane %v1030, 1
      %v1032 = vadd.f32 %v1030, %v1031
      %s1033 = vtos %v1032
      %s1034 = smul.f32 %s1033, 0.00026041668
      %v1035 = vld [vmem:[#allocation3] sm:$0xf]
      %v1036 = vsel %vm724, %v1035, 0.0
      %1037 = vadd.xlane.f32.xlu0 %v1036
      %v1038 = vpop.xlane.xlu0 %1037
      %v1039 = vrot.slane %v1038, 4
      %v1040 = vadd.f32 %v1038, %v1039
      %v1041 = vrot.slane %v1040, 2
      %v1042 = vadd.f32 %v1040, %v1041
      %v1043 = vrot.slane %v1042, 1
      %v1044 = vadd.f32 %v1042, %v1043
      %s1045 = vtos %v1044
      %s1046 = smul.f32 %s1045, 0.01484375
      %s1047 = sadd.f32 %s1034, %s1046
      %v1048 = vstv %s1047
      %1049 = vst [vmem:[#allocation9] sm:$0xff] %v1048
    $region29: #{tpu_custom_call.1} parent=1 // pred_fallthru
      _
    // Predicated region
    $region30: #{tpu_custom_call.1} parent=1 // pred_check
      _
    $region31: #{tpu_custom_call.1} parent=1 // pred_check_branch
      %1051 = sbr.rel (0) target = $region33
    $region32: #{tpu_custom_call.1} parent=1 // pred_region
      %s1053 = ssub.s32 128, 128
      %1054 = vsyncadd [#allocation6], %s1053
      %s1056 = sshll.u32 [#allocation9], 4
      %s1057 = int_to_ptr.vmem [resolvable:$true] %s1056
      %1059 = dma.vmem_to_hbm [thread:$0]  %s1057, 128, %s3, [#allocation6]
    $region33: #{tpu_custom_call.1} parent=1 // pred_fallthru
      _
    // Predicated region
    $region34: #{tpu_custom_call.1} parent=1 // pred_check
      _
    $region35: #{tpu_custom_call.1} parent=1 // pred_check_branch
      %1061 = sbr.rel (0) target = $region37
    $region36: #{tpu_custom_call.1} parent=1 // pred_region
      %1062 = dma.done [#allocation6], 128
    $region37: #{tpu_custom_call.1} parent=1 // pred_fallthru
      _
    %1063 = vsyncpa [#allocation5], 1
    %1064 = vsyncpa [#allocation8], 1
    %1065 = vsyncpa [#allocation6], 1

</llo_original>
